<compile_context>
chip_gen: v7x
topology: tpu7x:2x2x1
jax: 0.10.0
libtpu: 0.0.40
codegen_flags: <defaults>
</compile_context>

<pallas_src>
import math

import jax
import jax.numpy as jnp
from jax import lax
from jax.experimental import pallas as pl
from jax.experimental.pallas import tpu as pltpu


def _round_up(v, m):
    return ((v + m - 1) // m) * m


def make_sinkhorn_dual_kernel(Nx, Ny, d, eps, n_iter, lamda, atol, rtol,
                              thresh=100.0):
    """Kernel body: one grid step == one SinkhornLoss.forward() dual objective."""
    balanced = lamda is None
    eps = float(eps)
    logZ = math.log((2.0 * math.pi * eps) ** (d / 2.0))
    if not balanced:
        lam = float(lamda)
        expo = lam / (lam + eps)          # exponent of (p/s)
        dual_coef = eps / (lam + eps)     # multiplies the eps-scaled duals a/eps, b/eps
        eps_over_lam = eps / lam

    use_mxu_cost = d >= 3                       # MXU cost matrix once d is non-trivial
    use_mxu_matvec = (Nx * Ny) >= (256 * 256)   # MXU only for K@v on large problems
    atol = float(atol)
    rtol = float(rtol)
    thresh = float(thresh)
    n_iter = int(n_iter)
    tiny = 1e-30

    def kernel(x_ref, yt_ref, xw_ref, yw_ref, out_ref, K_ref, Ktu_ref):
        x = x_ref[...]          # (Nx, d)   pre-scaled by 1/(scale*sqrt(2*eps))
        yt = yt_ref[...]        # (d, Ny)
        xw = xw_ref[...]        # (Nx, 1)   0.0 on padded rows
        yw = yw_ref[...]        # (1, Ny)   0.0 on padded cols
        row_valid = xw > 0.0
        col_valid = yw > 0.0
        log_xw = jnp.log(xw)    # -inf on padded rows -> kills K there
        log_yw = jnp.log(yw)

        def compute_Ce():
            # ||x' - y'||^2 == C / (2*scale^2*eps) thanks to the wrapper pre-scale.
            if use_mxu_cost:
                x2 = jnp.sum(x * x, axis=1, keepdims=True)
                y2 = jnp.sum(yt * yt, axis=0, keepdims=True)
                return jnp.maximum(
                    x2 + y2 - 2.0 * jnp.dot(x, yt,
                                            preferred_element_type=jnp.float32),
                    0.0)
            C = jnp.zeros((Nx, Ny), jnp.float32)
            for k in range(d):                    # d tiny & static -> unrolled VPU
                diff = x[:, k:k + 1] - yt[k:k + 1, :]
                C = C + diff * diff
            return C

        def getK(Ce, a_e, b_e):
            # exp(-(C+a+b)/eps - logZ) * xw * yw, log-weights folded into the exp.
            return jnp.exp(-(Ce + a_e + b_e + logZ) + log_xw + log_yw)

        def matvecT(K, u):      # K^T @ u -> (1, Ny); sublane reduce, no transpose
            return jnp.sum(K * u, axis=0, keepdims=True)

        def matvec(K, v):       # K @ v -> (Nx, 1)
            if use_mxu_matvec:
                return lax.dot_general(K, v, (((1,), (1,)), ((), ())),
                                       preferred_element_type=jnp.float32)
            return jnp.sum(K * v, axis=1, keepdims=True)

        if balanced:
            def proxdiv(p, log_p, s, dual_e):
                return p / jnp.maximum(s, tiny)
        else:
            def proxdiv(p, log_p, s, dual_e):
                return jnp.exp(expo * (log_p - jnp.log(jnp.maximum(s, tiny)))
                               + dual_coef * dual_e)

        # ---- initial state (warm_start=False => fresh every forward) ----
        u0 = row_valid.astype(jnp.float32)        # ones on valid rows, zeros on padding
        v0 = col_valid.astype(jnp.float32)
        a0 = jnp.zeros((Nx, 1), jnp.float32)      # a / eps
        b0 = jnp.zeros((1, Ny), jnp.float32)      # b / eps
        K0 = getK(compute_Ce(), a0, b0)
        K_ref[...] = K0
        Ktu_ref[...] = jnp.sum(K0, axis=0, keepdims=True)  # K0^T u0 (padded rows are 0)

        rtol_yw = rtol * jnp.max(jnp.abs(yw))     # hoisted loop invariant

        # ---- Sinkhorn loop with real early exit ----
        def cond_fn(carry):
            i, conv = carry[0], carry[1]
            return jnp.logical_and(i < n_iter, jnp.logical_not(conv))

        def body_fn(carry):
            i, _, u, v, a_e, b_e, u_prev = carry
            K = K_ref[...]
            Ktu = Ktu_ref[...]                    # K^T @ u for the current (K, u)

            v_new = proxdiv(yw, log_yw, Ktu, b_e)     # (1, Ny)
            Kv = matvec(K, v_new)                     # (Nx, 1)
            u_new = proxdiv(xw, log_xw, Kv, a_e)      # (Nx, 1)
            Ktu_new = matvecT(K, u_new)               # reused for check + next iter

            max_u = jnp.max(jnp.abs(u_new))
            max_v = jnp.max(jnp.abs(v_new))
            if balanced:
                err = jnp.max(jnp.abs(v_new * Ktu_new - yw))
                conv = jnp.logical_or(err < atol, err < rtol_yw)
                u_prev_new = u_prev
            else:
                err = jnp.max(jnp.abs(u_new - u_prev))
                conv = jnp.logical_or(err < atol, err < rtol * max_u)
                u_prev_new = u_new

            need_stab = jnp.logical_and(jnp.maximum(max_u, max_v) > thresh,
                                        jnp.logical_not(conv))

            log_u = jnp.where(row_valid, jnp.log(jnp.maximum(u_new, tiny)), 0.0)
            log_v = jnp.where(col_valid, jnp.log(jnp.maximum(v_new, tiny)), 0.0)
            a_e2 = jnp.where(need_stab, a_e - log_u, a_e)
            b_e2 = jnp.where(need_stab, b_e - log_v, b_e)
            u2 = jnp.where(need_stab, jnp.ones_like(u_new), u_new)
            v2 = jnp.where(need_stab, jnp.ones_like(v_new), v_new)

            Ktu_ref[...] = Ktu_new

            # Full-matrix exp (and Ce recompute) only when stabilization fires.
            @pl.when(need_stab)
            def _stab():
                Knew = getK(compute_Ce(), a_e2, b_e2)
                K_ref[...] = Knew
                Ktu_ref[...] = jnp.sum(Knew, axis=0, keepdims=True)   # u2 == 1

            return (i + 1, conv, u2, v2, a_e2, b_e2, u_prev_new)

        init = (jnp.int32(0), jnp.zeros((), jnp.bool_), u0, v0, a0, b0, u0)
        _, _, u, v, a_e, b_e, _ = lax.while_loop(cond_fn, body_fn, init)

        # ---- dual objective (obj_dual); everything kept in "per-eps" units ----
        Ce = compute_Ce()
        log_u_f = jnp.where(row_valid, jnp.log(jnp.maximum(u, tiny)), 0.0)
        log_v_f = jnp.where(col_valid, jnp.log(jnp.maximum(v, tiny)), 0.0)
        fe = a_e - log_u_f          # f / eps, (Nx, 1)
        ge = b_e - log_v_f          # g / eps, (1, Ny)

        # TODO(synk): tile this epilogue over Ny with an online logsumexp for very
        #             large Nx*Ny (VMEM pressure); full-matrix form kept for small pairs.
        z1 = -Ce - ge + log_yw                                   # (Nx, Ny)
        m1 = jnp.max(z1, axis=1, keepdims=True)
        fce = m1 + jnp.log(jnp.sum(jnp.exp(z1 - m1), axis=1, keepdims=True)) - logZ
        fce = jnp.where(row_valid, fce, 0.0)

        z2 = -Ce - fe + log_xw                                   # (Nx, Ny)
        m2 = jnp.max(z2, axis=0, keepdims=True)
        gce = m2 + jnp.log(jnp.sum(jnp.exp(z2 - m2), axis=0, keepdims=True)) - logZ
        gce = jnp.where(col_valid, gce, 0.0)

        if balanced:
            f1 = eps * jnp.sum(fce * xw)
            f2 = eps * jnp.sum(gce * yw)
        else:
            f1 = lam * jnp.sum(xw * (jnp.exp(fce * eps_over_lam) - 1.0))
            f2 = lam * jnp.sum(yw * (jnp.exp(gce * eps_over_lam) - 1.0))

        # NOTE: like the PyTorch reference, no extra max-shift in term3.
        term3 = eps * jnp.sum(jnp.exp(-(Ce + fce + gce + logZ) + log_xw + log_yw))

        result = -f1 - f2 - term3
        out_ref[...] = jnp.full((1, 128), result, jnp.float32)   # lane-dense store

    return kernel


def make_paths_loss_call(P, Nx, Ny, d, *, eps, n_iter, lamda=None,
                         atol=1e-4, rtol=1e-4):
    """One gridded pallas_call evaluating all P pairs (grid axis is parallel)."""
    kernel = make_sinkhorn_dual_kernel(Nx, Ny, d, eps, n_iter, lamda, atol, rtol)

    mat_bytes = Nx * Ny * 4
    try:
        cap = int(pltpu.get_tpu_info().vmem_capacity_bytes)
    except Exception:
        cap = 64 * 1024 * 1024
    # K scratch + a handful of transient (Nx,Ny) f32 values + double-buffered inputs,
    # clamped to 75% of physical VMEM (headroom for Mosaic internal scratch).
    vmem_bytes = int(min(int(0.75 * cap),
                         max(16 * 1024 * 1024, 12 * mat_bytes)))

    grid_spec = pltpu.PrefetchScalarGridSpec(
        num_scalar_prefetch=0,
        grid=(P,),
        in_specs=[
            pl.BlockSpec((None, Nx, d), lambda i: (i, 0, 0)),   # x
            pl.BlockSpec((None, d, Ny), lambda i: (i, 0, 0)),   # y^T
            pl.BlockSpec((None, Nx, 1), lambda i: (i, 0, 0)),   # x_w
            pl.BlockSpec((None, 1, Ny), lambda i: (i, 0, 0)),   # y_w
        ],
        out_specs=pl.BlockSpec((None, 1, 128), lambda i: (i, 0, 0)),
        scratch_shapes=[
            pltpu.VMEM((Nx, Ny), jnp.float32),   # K (updated in place)
            pltpu.VMEM((1, Ny), jnp.float32),    # K^T u carried across iterations
        ],
    )

    return pl.pallas_call(
        kernel,
        out_shape=jax.ShapeDtypeStruct((P, 1, 128), jnp.float32),
        grid_spec=grid_spec,
        compiler_params=pltpu.CompilerParams(
            dimension_semantics=("parallel",),
            vmem_limit_bytes=vmem_bytes),
    )


class PathsLossPallas:
    """JAX/Pallas port of PathsLoss (forward pass only, branching_rate_fn=None)."""

    def __init__(self, x, tia, M, tau, dt, sinkhorn_iters, scale_factors,
                 lamda_unbal=None, warm_start=False, branching_rate_fn=None):
        # TODO(synk): branching_rate_fn weight updates (update_weights) not ported;
        #             uniform weights are used as in the default configuration.
        # TODO(synk): warm_start=True (reusing u/v/a/b across forward() calls) not ported.
        # TODO(synk): a blocked (streamed-over-Ny) Sinkhorn for problems that exceed
        #             v7x's 64 MiB VMEM is left for a future revision.
        assert branching_rate_fn is None
        self.dt = float(dt)
        eps = float(tau) * float(dt)
        T = int(len(x) / 2)
        d = int(x[0].shape[1])

        pairs = []
        for i in range(T):
            if tia[2 * i]:
                xi, yi = 2 * i, 2 * i + 1
            else:
                xi, yi = 2 * i - 1, 2 * i + 1
            pairs.append((xi, yi, float(scale_factors[2 * i])))

        P = len(pairs)
        Nx_pad = _round_up(max(max(int(M[xi]) for xi, _, _ in pairs), 8), 8)
        Ny_pad = _round_up(max(max(int(M[yi]) for _, yi, _ in pairs), 128), 128)

        xs, yts, xws, yws = [], [], [], []
        for (xi, yi, scale) in pairs:
            Nx_i, Ny_i = int(M[xi]), int(M[yi])
            # Fold 1/(2*scale^2*eps) into the coordinates once (host-side), so the
            # kernel's squared distance equals C/(2*scale^2*eps) for every pair.
            pres = 1.0 / (scale * math.sqrt(2.0 * eps))
            x_i = jnp.asarray(x[xi], jnp.float32) * pres
            y_i = jnp.asarray(x[yi], jnp.float32) * pres
            xs.append(jnp.zeros((Nx_pad, d), jnp.float32).at[:Nx_i, :].set(x_i))
            yts.append(jnp.zeros((d, Ny_pad), jnp.float32).at[:, :Ny_i].set(y_i.T))
            xws.append(jnp.zeros((Nx_pad, 1), jnp.float32).at[:Nx_i, :].set(1.0 / Nx_i))
            yws.append(jnp.zeros((1, Ny_pad), jnp.float32).at[:, :Ny_i].set(1.0 / Ny_i))

        self._x_all = jnp.stack(xs)     # (P, Nx_pad, d)
        self._yt_all = jnp.stack(yts)   # (P, d, Ny_pad)
        self._xw_all = jnp.stack(xws)   # (P, Nx_pad, 1)
        self._yw_all = jnp.stack(yws)   # (P, 1, Ny_pad)

        call = make_paths_loss_call(P, Nx_pad, Ny_pad, d, eps=eps,
                                    n_iter=int(sinkhorn_iters), lamda=lamda_unbal)
        inv_dt = 1.0 / self.dt

        def _fwd(xa, yta, xwa, ywa):
            out = call(xa, yta, xwa, ywa)          # (P, 1, 128)
            return jnp.sum(out[:, 0, 0]) * inv_dt

        self._fwd = jax.jit(_fwd)

    def forward(self):
        return self._fwd(self._x_all, self._yt_all, self._xw_all, self._yw_all)


if __name__ == "__main__":
    key = jax.random.PRNGKey(0)
    sizes = [8, 16, 8, 16]      # number of points per time slice
    d = 2
    keys = jax.random.split(key, len(sizes))
    x = [jax.random.normal(k, (n, d), dtype=jnp.float32)
         for k, n in zip(keys, sizes)]

    tia = [True, True, False, True]          # second pair uses x[1] vs x[3]
    scale_factors = [2.0, 0.0, 2.5, 0.0]     # only even indices are read
    tau, dt = 2.0, 0.5                       # eps = tau * dt = 1.0
    sinkhorn_iters = 50

    model = PathsLossPallas(x, tia, sizes, tau, dt, sinkhorn_iters,
                            scale_factors, lamda_unbal=None)
    out = model.forward()
    out = jax.block_until_ready(out)
    assert bool(jnp.isfinite(out)), f"non-finite result: {out}"
    print("KERNEL_OK")
</pallas_src>

<mosaic_0001>
module attributes {stable_mosaic.version = 11 : i64} {
  func.func @kernel(%arg0: i32, %arg1: memref<1x16x2xf32, #tpu.memory_space<vmem>>, %arg2: memref<1x2x128xf32, #tpu.memory_space<vmem>>, %arg3: memref<1x16x1xf32, #tpu.memory_space<vmem>>, %arg4: memref<1x1x128xf32, #tpu.memory_space<vmem>>, %arg5: memref<1x1x128xf32, #tpu.memory_space<vmem>>, %arg6: memref<16x128xf32, #tpu.memory_space<vmem>>, %arg7: memref<1x128xf32, #tpu.memory_space<vmem>>) attributes {dimension_semantics = [#tpu.dimension_semantics<parallel>], iteration_bounds = array<i64: 2>, scalar_prefetch = 0 : i64, scratch_operands = 2 : i64, tpu.core_type = #tpu.core_type<tc>, window_params = [{transform_indices = @transform_0, window_bounds = array<i64: 1, 16, 2>}, {transform_indices = @transform_1, window_bounds = array<i64: 1, 2, 128>}, {transform_indices = @transform_2, window_bounds = array<i64: 1, 16, 1>}, {transform_indices = @transform_3, window_bounds = array<i64: 1, 1, 128>}, {transform_indices = @transform_4, window_bounds = array<i64: 1, 1, 128>}]} {
    %c0 = arith.constant 0 : index
    %c0_0 = arith.constant 0 : index
    %c0_1 = arith.constant 0 : index
    %0 = vector.load %arg1[%c0, %c0_0, %c0_1] : memref<1x16x2xf32, #tpu.memory_space<vmem>>, vector<1x16x2xf32>
    %1 = vector.shape_cast %0 : vector<1x16x2xf32> to vector<16x2xf32>
    %c0_2 = arith.constant 0 : index
    %c0_3 = arith.constant 0 : index
    %c0_4 = arith.constant 0 : index
    %2 = vector.load %arg2[%c0_2, %c0_3, %c0_4] : memref<1x2x128xf32, #tpu.memory_space<vmem>>, vector<1x2x128xf32>
    %3 = vector.shape_cast %2 : vector<1x2x128xf32> to vector<2x128xf32>
    %c0_5 = arith.constant 0 : index
    %c0_6 = arith.constant 0 : index
    %c0_7 = arith.constant 0 : index
    %4 = vector.load %arg3[%c0_5, %c0_6, %c0_7] : memref<1x16x1xf32, #tpu.memory_space<vmem>>, vector<1x16x1xf32>
    %5 = vector.shape_cast %4 : vector<1x16x1xf32> to vector<16x1xf32>
    %c0_8 = arith.constant 0 : index
    %c0_9 = arith.constant 0 : index
    %c0_10 = arith.constant 0 : index
    %6 = vector.load %arg4[%c0_8, %c0_9, %c0_10] : memref<1x1x128xf32, #tpu.memory_space<vmem>>, vector<1x1x128xf32>
    %7 = vector.shape_cast %6 : vector<1x1x128xf32> to vector<1x128xf32>
    %cst = arith.constant 0.000000e+00 : f32
    %8 = vector.broadcast %cst : f32 to vector<16x1xf32>
    %9 = arith.cmpf ogt, %5, %8 : vector<16x1xf32>
    %cst_11 = arith.constant 0.000000e+00 : f32
    %10 = vector.broadcast %cst_11 : f32 to vector<1x128xf32>
    %11 = arith.cmpf ogt, %7, %10 : vector<1x128xf32>
    %12 = math.log %5 : vector<16x1xf32>
    %13 = math.log %7 : vector<1x128xf32>
    %14 = arith.extui %9 : vector<16x1xi1> to vector<16x1xi32>
    %15 = arith.sitofp %14 : vector<16x1xi32> to vector<16x1xf32>
    %16 = arith.extui %11 : vector<1x128xi1> to vector<1x128xi32>
    %17 = arith.sitofp %16 : vector<1x128xi32> to vector<1x128xf32>
    %cst_12 = arith.constant 0.000000e+00 : f32
    %18 = vector.broadcast %cst_12 : f32 to vector<16x1xf32>
    %cst_13 = arith.constant 0.000000e+00 : f32
    %19 = vector.broadcast %cst_13 : f32 to vector<1x128xf32>
    %cst_14 = arith.constant 0.000000e+00 : f32
    %20 = vector.broadcast %cst_14 : f32 to vector<16x128xf32>
    %21 = vector.extract_strided_slice %1 {offsets = [0, 0], sizes = [16, 1], strides = [1, 1]} : vector<16x2xf32> to vector<16x1xf32>
    %22 = vector.extract_strided_slice %3 {offsets = [0, 0], sizes = [1, 128], strides = [1, 1]} : vector<2x128xf32> to vector<1x128xf32>
    %23 = vector.broadcast %21 : vector<16x1xf32> to vector<16x128xf32>
    %24 = vector.broadcast %22 : vector<1x128xf32> to vector<16x128xf32>
    %25 = arith.subf %23, %24 : vector<16x128xf32>
    %26 = arith.mulf %25, %25 : vector<16x128xf32>
    %27 = arith.addf %20, %26 : vector<16x128xf32>
    %28 = vector.extract_strided_slice %1 {offsets = [0, 1], sizes = [16, 1], strides = [1, 1]} : vector<16x2xf32> to vector<16x1xf32>
    %29 = vector.extract_strided_slice %3 {offsets = [1, 0], sizes = [1, 128], strides = [1, 1]} : vector<2x128xf32> to vector<1x128xf32>
    %30 = vector.broadcast %28 : vector<16x1xf32> to vector<16x128xf32>
    %31 = vector.broadcast %29 : vector<1x128xf32> to vector<16x128xf32>
    %32 = arith.subf %30, %31 : vector<16x128xf32>
    %33 = arith.mulf %32, %32 : vector<16x128xf32>
    %34 = arith.addf %27, %33 : vector<16x128xf32>
    %35 = vector.broadcast %18 : vector<16x1xf32> to vector<16x128xf32>
    %36 = arith.addf %34, %35 : vector<16x128xf32>
    %37 = vector.broadcast %19 : vector<1x128xf32> to vector<16x128xf32>
    %38 = arith.addf %36, %37 : vector<16x128xf32>
    %cst_15 = arith.constant 1.83787704 : f32
    %39 = vector.broadcast %cst_15 : f32 to vector<16x128xf32>
    %40 = arith.addf %38, %39 : vector<16x128xf32>
    %cst_16 = arith.constant 0.000000e+00 : f32
    %41 = vector.broadcast %cst_16 : f32 to vector<16x128xf32>
    %42 = arith.subf %41, %40 : vector<16x128xf32>
    %43 = vector.broadcast %12 : vector<16x1xf32> to vector<16x128xf32>
    %44 = arith.addf %42, %43 : vector<16x128xf32>
    %45 = vector.broadcast %13 : vector<1x128xf32> to vector<16x128xf32>
    %46 = arith.addf %44, %45 : vector<16x128xf32>
    %47 = math.exp %46 : vector<16x128xf32>
    %c0_17 = arith.constant 0 : index
    %c0_18 = arith.constant 0 : index
    %48 = vector.load %arg6[%c0_17, %c0_18] : memref<16x128xf32, #tpu.memory_space<vmem>>, vector<16x128xf32>
    tpu.vector_store %arg6[%c0_17, %c0_18], %47 {strides = array<i32>} : memref<16x128xf32, #tpu.memory_space<vmem>>, vector<16x128xf32>,
    %cst_19 = arith.constant dense<0.000000e+00> : vector<128xf32>
    %49 = vector.multi_reduction <add>, %47, %cst_19 [0] : vector<16x128xf32> to vector<128xf32>
    %50 = vector.shape_cast %49 : vector<128xf32> to vector<1x128xf32>
    %c0_20 = arith.constant 0 : index
    %c0_21 = arith.constant 0 : index
    %51 = vector.load %arg7[%c0_20, %c0_21] : memref<1x128xf32, #tpu.memory_space<vmem>>, vector<1x128xf32>
    tpu.vector_store %arg7[%c0_20, %c0_21], %50 {strides = array<i32>} : memref<1x128xf32, #tpu.memory_space<vmem>>, vector<1x128xf32>,
    %52 = math.absf %7 : vector<1x128xf32>
    %53 = vector.shape_cast %52 : vector<1x128xf32> to vector<1x1x128xf32>
    %cst_22 = arith.constant dense<0xFF800000> : vector<1xf32>
    %54 = vector.multi_reduction <maximumf>, %53, %cst_22 [1, 2] : vector<1x1x128xf32> to vector<1xf32>
    %55 = vector.shape_cast %54 : vector<1xf32> to vector<1x1x1xf32>
    %56 = vector.extract %55[0, 0, 0] : f32 from vector<1x1x1xf32>
    %cst_23 = arith.constant 9.99999974E-5 : f32
    %57 = arith.mulf %cst_23, %56 : f32
    %c0_i32 = arith.constant 0 : i32
    %false = arith.constant false
    %58:6 = scf.while (%arg8 = %c0_i32, %arg9 = %false, %arg10 = %15, %arg11 = %17, %arg12 = %18, %arg13 = %19) : (i32, i1, vector<16x1xf32>, vector<1x128xf32>, vector<16x1xf32>, vector<1x128xf32>) -> (i32, i1, vector<16x1xf32>, vector<1x128xf32>, vector<16x1xf32>, vector<1x128xf32>) {
      %c50_i32 = arith.constant 50 : i32
      %161 = arith.cmpi slt, %arg8, %c50_i32 : i32
      %true = arith.constant true
      %162 = arith.xori %arg9, %true : i1
      %163 = arith.andi %161, %162 : i1
      scf.condition(%163) %arg8, %arg9, %arg10, %arg11, %arg12, %arg13 : i32, i1, vector<16x1xf32>, vector<1x128xf32>, vector<16x1xf32>, vector<1x128xf32>
    } do {
    ^bb0(%arg8: i32, %arg9: i1, %arg10: vector<16x1xf32>, %arg11: vector<1x128xf32>, %arg12: vector<16x1xf32>, %arg13: vector<1x128xf32>):
      %c0_51 = arith.constant 0 : index
      %c0_52 = arith.constant 0 : index
      %161 = vector.load %arg6[%c0_51, %c0_52] : memref<16x128xf32, #tpu.memory_space<vmem>>, vector<16x128xf32>
      %c0_53 = arith.constant 0 : index
      %c0_54 = arith.constant 0 : index
      %162 = vector.load %arg7[%c0_53, %c0_54] : memref<1x128xf32, #tpu.memory_space<vmem>>, vector<1x128xf32>
      %cst_55 = arith.constant 1.000000e-30 : f32
      %163 = vector.broadcast %cst_55 : f32 to vector<1x128xf32>
      %164 = arith.maximumf %162, %163 : vector<1x128xf32>
      %165 = arith.divf %7, %164 : vector<1x128xf32>
      %166 = vector.broadcast %165 : vector<1x128xf32> to vector<16x128xf32>
      %167 = arith.mulf %161, %166 : vector<16x128xf32>
      %cst_56 = arith.constant dense<0.000000e+00> : vector<16xf32>
      %168 = vector.multi_reduction <add>, %167, %cst_56 [1] : vector<16x128xf32> to vector<16xf32>
      %169 = vector.shape_cast %168 : vector<16xf32> to vector<16x1xf32>
      %cst_57 = arith.constant 1.000000e-30 : f32
      %170 = vector.broadcast %cst_57 : f32 to vector<16x1xf32>
      %171 = arith.maximumf %169, %170 : vector<16x1xf32>
      %172 = arith.divf %5, %171 : vector<16x1xf32>
      %173 = vector.broadcast %172 : vector<16x1xf32> to vector<16x128xf32>
      %174 = arith.mulf %161, %173 : vector<16x128xf32>
      %cst_58 = arith.constant dense<0.000000e+00> : vector<128xf32>
      %175 = vector.multi_reduction <add>, %174, %cst_58 [0] : vector<16x128xf32> to vector<128xf32>
      %176 = vector.shape_cast %175 : vector<128xf32> to vector<1x128xf32>
      %177 = math.absf %172 : vector<16x1xf32>
      %178 = vector.shape_cast %177 : vector<16x1xf32> to vector<1x16x1xf32>
      %cst_59 = arith.constant dense<0xFF800000> : vector<1xf32>
      %179 = vector.multi_reduction <maximumf>, %178, %cst_59 [1, 2] : vector<1x16x1xf32> to vector<1xf32>
      %180 = vector.shape_cast %179 : vector<1xf32> to vector<1x1x1xf32>
      %181 = vector.extract %180[0, 0, 0] : f32 from vector<1x1x1xf32>
      %182 = math.absf %165 : vector<1x128xf32>
      %183 = vector.shape_cast %182 : vector<1x128xf32> to vector<1x1x128xf32>
      %cst_60 = arith.constant dense<0xFF800000> : vector<1xf32>
      %184 = vector.multi_reduction <maximumf>, %183, %cst_60 [1, 2] : vector<1x1x128xf32> to vector<1xf32>
      %185 = vector.shape_cast %184 : vector<1xf32> to vector<1x1x1xf32>
      %186 = vector.extract %185[0, 0, 0] : f32 from vector<1x1x1xf32>
      %187 = arith.mulf %165, %176 : vector<1x128xf32>
      %188 = arith.subf %187, %7 : vector<1x128xf32>
      %189 = math.absf %188 : vector<1x128xf32>
      %190 = vector.shape_cast %189 : vector<1x128xf32> to vector<1x1x128xf32>
      %cst_61 = arith.constant dense<0xFF800000> : vector<1xf32>
      %191 = vector.multi_reduction <maximumf>, %190, %cst_61 [1, 2] : vector<1x1x128xf32> to vector<1xf32>
      %192 = vector.shape_cast %191 : vector<1xf32> to vector<1x1x1xf32>
      %193 = vector.extract %192[0, 0, 0] : f32 from vector<1x1x1xf32>
      %cst_62 = arith.constant 9.99999974E-5 : f32
      %194 = arith.cmpf olt, %193, %cst_62 : f32
      %195 = arith.cmpf olt, %193, %57 : f32
      %196 = arith.ori %194, %195 : i1
      %197 = arith.maximumf %181, %186 : f32
      %cst_63 = arith.constant 1.000000e+02 : f32
      %198 = arith.cmpf ogt, %197, %cst_63 : f32
      %true = arith.constant true
      %199 = arith.xori %196, %true : i1
      %200 = arith.andi %198, %199 : i1
      %cst_64 = arith.constant 1.000000e-30 : f32
      %201 = vector.broadcast %cst_64 : f32 to vector<16x1xf32>
      %202 = arith.maximumf %172, %201 : vector<16x1xf32>
      %203 = math.log %202 : vector<16x1xf32>
      %cst_65 = arith.constant 0.000000e+00 : f32
      %204 = vector.broadcast %cst_65 : f32 to vector<16x1xf32>
      %205 = arith.select %9, %203, %204 : vector<16x1xi1>, vector<16x1xf32>
      %cst_66 = arith.constant 1.000000e-30 : f32
      %206 = vector.broadcast %cst_66 : f32 to vector<1x128xf32>
      %207 = arith.maximumf %165, %206 : vector<1x128xf32>
      %208 = math.log %207 : vector<1x128xf32>
      %cst_67 = arith.constant 0.000000e+00 : f32
      %209 = vector.broadcast %cst_67 : f32 to vector<1x128xf32>
      %210 = arith.select %11, %208, %209 : vector<1x128xi1>, vector<1x128xf32>
      %211 = arith.subf %arg12, %205 : vector<16x1xf32>
      %212 = arith.select %200, %211, %arg12 : vector<16x1xf32>
      %213 = arith.subf %arg13, %210 : vector<1x128xf32>
      %214 = arith.select %200, %213, %arg13 : vector<1x128xf32>
      %cst_68 = arith.constant 1.000000e+00 : f32
      %215 = vector.broadcast %cst_68 : f32 to vector<16x1xf32>
      %216 = arith.select %200, %215, %172 : vector<16x1xf32>
      %cst_69 = arith.constant 1.000000e+00 : f32
      %217 = vector.broadcast %cst_69 : f32 to vector<1x128xf32>
      %218 = arith.select %200, %217, %165 : vector<1x128xf32>
      %c0_70 = arith.constant 0 : index
      %c0_71 = arith.constant 0 : index
      %219 = vector.load %arg7[%c0_70, %c0_71] : memref<1x128xf32, #tpu.memory_space<vmem>>, vector<1x128xf32>
      tpu.vector_store %arg7[%c0_70, %c0_71], %176 {strides = array<i32>} : memref<1x128xf32, #tpu.memory_space<vmem>>, vector<1x128xf32>,
      %220 = arith.extui %200 : i1 to i32
      %c0_i32_72 = arith.constant 0 : i32
      %221 = arith.cmpi ne, %220, %c0_i32_72 : i32
      scf.if %221 {
        %cst_73 = arith.constant 0.000000e+00 : f32
        %223 = vector.broadcast %cst_73 : f32 to vector<16x128xf32>
        %224 = vector.extract_strided_slice %1 {offsets = [0, 0], sizes = [16, 1], strides = [1, 1]} : vector<16x2xf32> to vector<16x1xf32>
        %225 = vector.extract_strided_slice %3 {offsets = [0, 0], sizes = [1, 128], strides = [1, 1]} : vector<2x128xf32> to vector<1x128xf32>
        %226 = vector.broadcast %224 : vector<16x1xf32> to vector<16x128xf32>
        %227 = vector.broadcast %225 : vector<1x128xf32> to vector<16x128xf32>
        %228 = arith.subf %226, %227 : vector<16x128xf32>
        %229 = arith.mulf %228, %228 : vector<16x128xf32>
        %230 = arith.addf %223, %229 : vector<16x128xf32>
        %231 = vector.extract_strided_slice %1 {offsets = [0, 1], sizes = [16, 1], strides = [1, 1]} : vector<16x2xf32> to vector<16x1xf32>
        %232 = vector.extract_strided_slice %3 {offsets = [1, 0], sizes = [1, 128], strides = [1, 1]} : vector<2x128xf32> to vector<1x128xf32>
        %233 = vector.broadcast %231 : vector<16x1xf32> to vector<16x128xf32>
        %234 = vector.broadcast %232 : vector<1x128xf32> to vector<16x128xf32>
        %235 = arith.subf %233, %234 : vector<16x128xf32>
        %236 = arith.mulf %235, %235 : vector<16x128xf32>
        %237 = arith.addf %230, %236 : vector<16x128xf32>
        %238 = vector.broadcast %212 : vector<16x1xf32> to vector<16x128xf32>
        %239 = arith.addf %237, %238 : vector<16x128xf32>
        %240 = vector.broadcast %214 : vector<1x128xf32> to vector<16x128xf32>
        %241 = arith.addf %239, %240 : vector<16x128xf32>
        %cst_74 = arith.constant 1.83787704 : f32
        %242 = vector.broadcast %cst_74 : f32 to vector<16x128xf32>
        %243 = arith.addf %241, %242 : vector<16x128xf32>
        %cst_75 = arith.constant 0.000000e+00 : f32
        %244 = vector.broadcast %cst_75 : f32 to vector<16x128xf32>
        %245 = arith.subf %244, %243 : vector<16x128xf32>
        %246 = vector.broadcast %12 : vector<16x1xf32> to vector<16x128xf32>
        %247 = arith.addf %245, %246 : vector<16x128xf32>
        %248 = vector.broadcast %13 : vector<1x128xf32> to vector<16x128xf32>
        %249 = arith.addf %247, %248 : vector<16x128xf32>
        %250 = math.exp %249 : vector<16x128xf32>
        %c0_76 = arith.constant 0 : index
        %c0_77 = arith.constant 0 : index
        %251 = vector.load %arg6[%c0_76, %c0_77] : memref<16x128xf32, #tpu.memory_space<vmem>>, vector<16x128xf32>
        tpu.vector_store %arg6[%c0_76, %c0_77], %250 {strides = array<i32>} : memref<16x128xf32, #tpu.memory_space<vmem>>, vector<16x128xf32>,
        %cst_78 = arith.constant dense<0.000000e+00> : vector<128xf32>
        %252 = vector.multi_reduction <add>, %250, %cst_78 [0] : vector<16x128xf32> to vector<128xf32>
        %253 = vector.shape_cast %252 : vector<128xf32> to vector<1x128xf32>
        %c0_79 = arith.constant 0 : index
        %c0_80 = arith.constant 0 : index
        %254 = vector.load %arg7[%c0_79, %c0_80] : memref<1x128xf32, #tpu.memory_space<vmem>>, vector<1x128xf32>
        tpu.vector_store %arg7[%c0_79, %c0_80], %253 {strides = array<i32>} : memref<1x128xf32, #tpu.memory_space<vmem>>, vector<1x128xf32>,
      } else {
      }
      %c1_i32 = arith.constant 1 : i32
      %222 = arith.addi %arg8, %c1_i32 : i32
      scf.yield %222, %196, %216, %218, %212, %214 : i32, i1, vector<16x1xf32>, vector<1x128xf32>, vector<16x1xf32>, vector<1x128xf32>
    }
    %cst_24 = arith.constant 0.000000e+00 : f32
    %59 = vector.broadcast %cst_24 : f32 to vector<16x128xf32>
    %60 = vector.extract_strided_slice %1 {offsets = [0, 0], sizes = [16, 1], strides = [1, 1]} : vector<16x2xf32> to vector<16x1xf32>
    %61 = vector.extract_strided_slice %3 {offsets = [0, 0], sizes = [1, 128], strides = [1, 1]} : vector<2x128xf32> to vector<1x128xf32>
    %62 = vector.broadcast %60 : vector<16x1xf32> to vector<16x128xf32>
    %63 = vector.broadcast %61 : vector<1x128xf32> to vector<16x128xf32>
    %64 = arith.subf %62, %63 : vector<16x128xf32>
    %65 = arith.mulf %64, %64 : vector<16x128xf32>
    %66 = arith.addf %59, %65 : vector<16x128xf32>
    %67 = vector.extract_strided_slice %1 {offsets = [0, 1], sizes = [16, 1], strides = [1, 1]} : vector<16x2xf32> to vector<16x1xf32>
    %68 = vector.extract_strided_slice %3 {offsets = [1, 0], sizes = [1, 128], strides = [1, 1]} : vector<2x128xf32> to vector<1x128xf32>
    %69 = vector.broadcast %67 : vector<16x1xf32> to vector<16x128xf32>
    %70 = vector.broadcast %68 : vector<1x128xf32> to vector<16x128xf32>
    %71 = arith.subf %69, %70 : vector<16x128xf32>
    %72 = arith.mulf %71, %71 : vector<16x128xf32>
    %73 = arith.addf %66, %72 : vector<16x128xf32>
    %cst_25 = arith.constant 1.000000e-30 : f32
    %74 = vector.broadcast %cst_25 : f32 to vector<16x1xf32>
    %75 = arith.maximumf %58#2, %74 : vector<16x1xf32>
    %76 = math.log %75 : vector<16x1xf32>
    %cst_26 = arith.constant 0.000000e+00 : f32
    %77 = vector.broadcast %cst_26 : f32 to vector<16x1xf32>
    %78 = arith.select %9, %76, %77 : vector<16x1xi1>, vector<16x1xf32>
    %cst_27 = arith.constant 1.000000e-30 : f32
    %79 = vector.broadcast %cst_27 : f32 to vector<1x128xf32>
    %80 = arith.maximumf %58#3, %79 : vector<1x128xf32>
    %81 = math.log %80 : vector<1x128xf32>
    %cst_28 = arith.constant 0.000000e+00 : f32
    %82 = vector.broadcast %cst_28 : f32 to vector<1x128xf32>
    %83 = arith.select %11, %81, %82 : vector<1x128xi1>, vector<1x128xf32>
    %84 = arith.subf %58#4, %78 : vector<16x1xf32>
    %85 = arith.subf %58#5, %83 : vector<1x128xf32>
    %cst_29 = arith.constant 0.000000e+00 : f32
    %86 = vector.broadcast %cst_29 : f32 to vector<16x128xf32>
    %87 = arith.subf %86, %73 : vector<16x128xf32>
    %88 = vector.broadcast %85 : vector<1x128xf32> to vector<16x128xf32>
    %89 = arith.subf %87, %88 : vector<16x128xf32>
    %90 = vector.broadcast %13 : vector<1x128xf32> to vector<16x128xf32>
    %91 = arith.addf %89, %90 : vector<16x128xf32>
    %cst_30 = arith.constant dense<0xFF800000> : vector<16xf32>
    %92 = vector.multi_reduction <maximumf>, %91, %cst_30 [1] : vector<16x128xf32> to vector<16xf32>
    %93 = vector.shape_cast %92 : vector<16xf32> to vector<16x1xf32>
    %94 = vector.broadcast %93 : vector<16x1xf32> to vector<16x128xf32>
    %95 = arith.subf %91, %94 : vector<16x128xf32>
    %96 = math.exp %95 : vector<16x128xf32>
    %cst_31 = arith.constant dense<0.000000e+00> : vector<16xf32>
    %97 = vector.multi_reduction <add>, %96, %cst_31 [1] : vector<16x128xf32> to vector<16xf32>
    %98 = vector.shape_cast %97 : vector<16xf32> to vector<16x1xf32>
    %99 = math.log %98 : vector<16x1xf32>
    %100 = arith.addf %93, %99 : vector<16x1xf32>
    %cst_32 = arith.constant 1.83787704 : f32
    %101 = vector.broadcast %cst_32 : f32 to vector<16x1xf32>
    %102 = arith.subf %100, %101 : vector<16x1xf32>
    %cst_33 = arith.constant 0.000000e+00 : f32
    %103 = vector.broadcast %cst_33 : f32 to vector<16x1xf32>
    %104 = arith.select %9, %102, %103 : vector<16x1xi1>, vector<16x1xf32>
    %cst_34 = arith.constant 0.000000e+00 : f32
    %105 = vector.broadcast %cst_34 : f32 to vector<16x128xf32>
    %106 = arith.subf %105, %73 : vector<16x128xf32>
    %107 = vector.broadcast %84 : vector<16x1xf32> to vector<16x128xf32>
    %108 = arith.subf %106, %107 : vector<16x128xf32>
    %109 = vector.broadcast %12 : vector<16x1xf32> to vector<16x128xf32>
    %110 = arith.addf %108, %109 : vector<16x128xf32>
    %cst_35 = arith.constant dense<0xFF800000> : vector<128xf32>
    %111 = vector.multi_reduction <maximumf>, %110, %cst_35 [0] : vector<16x128xf32> to vector<128xf32>
    %112 = vector.shape_cast %111 : vector<128xf32> to vector<1x128xf32>
    %113 = vector.broadcast %112 : vector<1x128xf32> to vector<16x128xf32>
    %114 = arith.subf %110, %113 : vector<16x128xf32>
    %115 = math.exp %114 : vector<16x128xf32>
    %cst_36 = arith.constant dense<0.000000e+00> : vector<128xf32>
    %116 = vector.multi_reduction <add>, %115, %cst_36 [0] : vector<16x128xf32> to vector<128xf32>
    %117 = vector.shape_cast %116 : vector<128xf32> to vector<1x128xf32>
    %118 = math.log %117 : vector<1x128xf32>
    %119 = arith.addf %112, %118 : vector<1x128xf32>
    %cst_37 = arith.constant 1.83787704 : f32
    %120 = vector.broadcast %cst_37 : f32 to vector<1x128xf32>
    %121 = arith.subf %119, %120 : vector<1x128xf32>
    %cst_38 = arith.constant 0.000000e+00 : f32
    %122 = vector.broadcast %cst_38 : f32 to vector<1x128xf32>
    %123 = arith.select %11, %121, %122 : vector<1x128xi1>, vector<1x128xf32>
    %124 = arith.mulf %104, %5 : vector<16x1xf32>
    %125 = vector.shape_cast %124 : vector<16x1xf32> to vector<1x16x1xf32>
    %cst_39 = arith.constant dense<0.000000e+00> : vector<1xf32>
    %126 = vector.multi_reduction <add>, %125, %cst_39 [1, 2] : vector<1x16x1xf32> to vector<1xf32>
    %127 = vector.shape_cast %126 : vector<1xf32> to vector<1x1x1xf32>
    %128 = vector.extract %127[0, 0, 0] : f32 from vector<1x1x1xf32>
    %cst_40 = arith.constant 1.000000e+00 : f32
    %129 = arith.mulf %cst_40, %128 : f32
    %130 = arith.mulf %123, %7 : vector<1x128xf32>
    %131 = vector.shape_cast %130 : vector<1x128xf32> to vector<1x1x128xf32>
    %cst_41 = arith.constant dense<0.000000e+00> : vector<1xf32>
    %132 = vector.multi_reduction <add>, %131, %cst_41 [1, 2] : vector<1x1x128xf32> to vector<1xf32>
    %133 = vector.shape_cast %132 : vector<1xf32> to vector<1x1x1xf32>
    %134 = vector.extract %133[0, 0, 0] : f32 from vector<1x1x1xf32>
    %cst_42 = arith.constant 1.000000e+00 : f32
    %135 = arith.mulf %cst_42, %134 : f32
    %136 = vector.broadcast %104 : vector<16x1xf32> to vector<16x128xf32>
    %137 = arith.addf %73, %136 : vector<16x128xf32>
    %138 = vector.broadcast %123 : vector<1x128xf32> to vector<16x128xf32>
    %139 = arith.addf %137, %138 : vector<16x128xf32>
    %cst_43 = arith.constant 1.83787704 : f32
    %140 = vector.broadcast %cst_43 : f32 to vector<16x128xf32>
    %141 = arith.addf %139, %140 : vector<16x128xf32>
    %cst_44 = arith.constant 0.000000e+00 : f32
    %142 = vector.broadcast %cst_44 : f32 to vector<16x128xf32>
    %143 = arith.subf %142, %141 : vector<16x128xf32>
    %144 = vector.broadcast %12 : vector<16x1xf32> to vector<16x128xf32>
    %145 = arith.addf %143, %144 : vector<16x128xf32>
    %146 = vector.broadcast %13 : vector<1x128xf32> to vector<16x128xf32>
    %147 = arith.addf %145, %146 : vector<16x128xf32>
    %148 = math.exp %147 : vector<16x128xf32>
    %149 = vector.shape_cast %148 : vector<16x128xf32> to vector<1x16x128xf32>
    %cst_45 = arith.constant dense<0.000000e+00> : vector<1xf32>
    %150 = vector.multi_reduction <add>, %149, %cst_45 [1, 2] : vector<1x16x128xf32> to vector<1xf32>
    %151 = vector.shape_cast %150 : vector<1xf32> to vector<1x1x1xf32>
    %152 = vector.extract %151[0, 0, 0] : f32 from vector<1x1x1xf32>
    %cst_46 = arith.constant 1.000000e+00 : f32
    %153 = arith.mulf %cst_46, %152 : f32
    %cst_47 = arith.constant 0.000000e+00 : f32
    %154 = arith.subf %cst_47, %129 : f32
    %155 = arith.subf %154, %135 : f32
    %156 = arith.subf %155, %153 : f32
    %157 = vector.broadcast %156 : f32 to vector<1x128xf32>
    %c0_48 = arith.constant 0 : index
    %c0_49 = arith.constant 0 : index
    %c0_50 = arith.constant 0 : index
    %158 = vector.load %arg5[%c0_48, %c0_49, %c0_50] : memref<1x1x128xf32, #tpu.memory_space<vmem>>, vector<1x1x128xf32>
    %159 = vector.shape_cast %158 : vector<1x1x128xf32> to vector<1x128xf32>
    %160 = vector.shape_cast %157 : vector<1x128xf32> to vector<1x1x128xf32>
    tpu.vector_store %arg5[%c0_48, %c0_49, %c0_50], %160 {strides = array<i32>} : memref<1x1x128xf32, #tpu.memory_space<vmem>>, vector<1x1x128xf32>,
    return
  }
  func.func @transform_0(%arg0: i32) -> (i32, i32, i32) {
    %c0_i32 = arith.constant 0 : i32
    %c0_i32_0 = arith.constant 0 : i32
    %c0_i32_1 = arith.constant 0 : i32
    return %arg0, %c0_i32, %c0_i32_0 : i32, i32, i32
  }
  func.func @transform_1(%arg0: i32) -> (i32, i32, i32) {
    %c0_i32 = arith.constant 0 : i32
    %c0_i32_0 = arith.constant 0 : i32
    %c0_i32_1 = arith.constant 0 : i32
    return %arg0, %c0_i32, %c0_i32_0 : i32, i32, i32
  }
  func.func @transform_2(%arg0: i32) -> (i32, i32, i32) {
    %c0_i32 = arith.constant 0 : i32
    %c0_i32_0 = arith.constant 0 : i32
    %c0_i32_1 = arith.constant 0 : i32
    return %arg0, %c0_i32, %c0_i32_0 : i32, i32, i32
  }
  func.func @transform_3(%arg0: i32) -> (i32, i32, i32) {
    %c0_i32 = arith.constant 0 : i32
    %c0_i32_0 = arith.constant 0 : i32
    %c0_i32_1 = arith.constant 0 : i32
    return %arg0, %c0_i32, %c0_i32_0 : i32, i32, i32
  }
  func.func @transform_4(%arg0: i32) -> (i32, i32, i32) {
    %c0_i32 = arith.constant 0 : i32
    %c0_i32_0 = arith.constant 0 : i32
    %c0_i32_1 = arith.constant 0 : i32
    return %arg0, %c0_i32, %c0_i32_0 : i32, i32, i32
  }
}

</mosaic_0001>

<llo_original>
// kernel: _fwd.1
$region0: #{_fwd.1}
  #allocation0 [shape = 'u32[]', space=smem, size = 0x4, offset = 0x4, fixed_abs, tag = 'smem constant byte address 0x4 - core index']
  #allocation1 [shape = 'u32[144,128]{1,0:T(1,128)}', space=vmem, size = 0x12000, scoped, tag = 'internal scratch']
  #allocation2 [shape = 'f32[16,128]{1,0:T(8,128)}', space=vmem, size = 0x2000, scoped, tag = 'scratch operand']
  #allocation3 [shape = 'f32[1,128]{1,0:T(1,128)}', space=vmem, size = 0x200, scoped, tag = 'scratch operand']
  %s0 = inlined_call_operand.vmem [shape: f32[2,16,2], index: 0, kind: input, shape index: {}]
  %s1 = inlined_call_operand.vmem [shape: f32[2,2,128], index: 1, kind: input, shape index: {}]
  %s2 = inlined_call_operand.vmem [shape: f32[2,16,1], index: 2, kind: input, shape index: {}]
  %s3 = inlined_call_operand.vmem [shape: f32[2,1,128], index: 3, kind: input, shape index: {}]
  %s4 = inlined_call_operand.vmem [shape: f32[2,1,128], index: 4, kind: output, shape index: {}]
  %s5 = sld [smem:[#allocation0]]
  $region60: #{_fwd.1} parent=0
    _
  %s7 = ssub.s32 1, %s5
  %s8 = scalar_select 0, %s7, %s5
  loop: start=0, step=1, limit=4
  $region2: #{_fwd.1} parent=0 // loop_pre_header
    _
  $region3: #{_fwd.1} parent=0 // loop_header
    %s10 = sphi 0, %s14
    %p11 = scmp.ge.s32.totalorder %s10, 4
    %s20 = sphi 0, %s22
    %s23 = sphi 0, %s20
    %s24 = sphi 0, %s23
    %s40 = sphi 0, %s24
    %s46 = sphi 0, %s48
    %s49 = sphi 0, %s46
    %s50 = sphi 0, %s49
    %s66 = sphi 0, %s50
    %s72 = sphi 0, %s74
    %s75 = sphi 0, %s72
    %s76 = sphi 0, %s75
    %s92 = sphi 0, %s76
    %s98 = sphi 0, %s100
    %s101 = sphi 0, %s98
    %s102 = sphi 0, %s101
    %s118 = sphi 0, %s102
    %s124 = sphi 0, %s126
    %s127 = sphi 0, %s124
    %s128 = sphi 0, %s127
    %s144 = sphi 0, %s128
  $region4: #{_fwd.1} parent=0 // loop_header_branch
    %13 = sbr.rel (%p11) target = $region8
  $region5: #{_fwd.1} parent=0 // loop_body
    %s15 = ssub.s32 %s10, 1
    %s16 = ssub.s32 %s10, 2
    %s17 = sadd.s32 %s10, 1
    %s18 = ssub.s32 %s10, %s17
    %p19 = scmp.eq.s32.totalorder %s18, 0
    %s21 = sadd.s32 %s20, 1
    %s22 = scalar_select %p19, %s20, %s21
    %p25 = pneg %p19
    %p26 = scmp.eq.s32.totalorder %s10, 1
    %p27 = por %p25, %p26
    %p28 = scmp.ne.s32.totalorder %s20, %s23
    %p29 = scmp.eq.s32.totalorder %s10, 0
    %p30 = por %p28, %p29
    %p31 = scmp.ne.s32.totalorder %s20, %s23
    %p32 = scmp.eq.s32.totalorder %s15, 1
    %p33 = por %p31, %p32
    %p34 = scmp.ne.s32.totalorder %s23, %s24
    %p35 = scmp.eq.s32.totalorder %s15, 0
    %p36 = por %p34, %p35
    %p37 = scmp.ne.s32.totalorder %s23, %s24
    %p38 = scmp.eq.s32.totalorder %s16, 1
    %p39 = por %p37, %p38
    %p41 = scmp.ne.s32.totalorder %s24, %s40
    %p42 = scmp.eq.s32.totalorder %s16, 0
    %p43 = por %p41, %p42
    %s44 = ssub.s32 %s10, %s17
    %p45 = scmp.eq.s32.totalorder %s44, 0
    %s47 = sadd.s32 %s46, 1
    %s48 = scalar_select %p45, %s46, %s47
    %p51 = pneg %p45
    %p52 = scmp.eq.s32.totalorder %s10, 1
    %p53 = por %p51, %p52
    %p54 = scmp.ne.s32.totalorder %s46, %s49
    %p55 = scmp.eq.s32.totalorder %s10, 0
    %p56 = por %p54, %p55
    %p57 = scmp.ne.s32.totalorder %s46, %s49
    %p58 = scmp.eq.s32.totalorder %s15, 1
    %p59 = por %p57, %p58
    %p60 = scmp.ne.s32.totalorder %s49, %s50
    %p61 = scmp.eq.s32.totalorder %s15, 0
    %p62 = por %p60, %p61
    %p63 = scmp.ne.s32.totalorder %s49, %s50
    %p64 = scmp.eq.s32.totalorder %s16, 1
    %p65 = por %p63, %p64
    %p67 = scmp.ne.s32.totalorder %s50, %s66
    %p68 = scmp.eq.s32.totalorder %s16, 0
    %p69 = por %p67, %p68
    %s70 = ssub.s32 %s10, %s17
    %p71 = scmp.eq.s32.totalorder %s70, 0
    %s73 = sadd.s32 %s72, 1
    %s74 = scalar_select %p71, %s72, %s73
    %p77 = pneg %p71
    %p78 = scmp.eq.s32.totalorder %s10, 1
    %p79 = por %p77, %p78
    %p80 = scmp.ne.s32.totalorder %s72, %s75
    %p81 = scmp.eq.s32.totalorder %s10, 0
    %p82 = por %p80, %p81
    %p83 = scmp.ne.s32.totalorder %s72, %s75
    %p84 = scmp.eq.s32.totalorder %s15, 1
    %p85 = por %p83, %p84
    %p86 = scmp.ne.s32.totalorder %s75, %s76
    %p87 = scmp.eq.s32.totalorder %s15, 0
    %p88 = por %p86, %p87
    %p89 = scmp.ne.s32.totalorder %s75, %s76
    %p90 = scmp.eq.s32.totalorder %s16, 1
    %p91 = por %p89, %p90
    %p93 = scmp.ne.s32.totalorder %s76, %s92
    %p94 = scmp.eq.s32.totalorder %s16, 0
    %p95 = por %p93, %p94
    %s96 = ssub.s32 %s10, %s17
    %p97 = scmp.eq.s32.totalorder %s96, 0
    %s99 = sadd.s32 %s98, 1
    %s100 = scalar_select %p97, %s98, %s99
    %p103 = pneg %p97
    %p104 = scmp.eq.s32.totalorder %s10, 1
    %p105 = por %p103, %p104
    %p106 = scmp.ne.s32.totalorder %s98, %s101
    %p107 = scmp.eq.s32.totalorder %s10, 0
    %p108 = por %p106, %p107
    %p109 = scmp.ne.s32.totalorder %s98, %s101
    %p110 = scmp.eq.s32.totalorder %s15, 1
    %p111 = por %p109, %p110
    %p112 = scmp.ne.s32.totalorder %s101, %s102
    %p113 = scmp.eq.s32.totalorder %s15, 0
    %p114 = por %p112, %p113
    %p115 = scmp.ne.s32.totalorder %s101, %s102
    %p116 = scmp.eq.s32.totalorder %s16, 1
    %p117 = por %p115, %p116
    %p119 = scmp.ne.s32.totalorder %s102, %s118
    %p120 = scmp.eq.s32.totalorder %s16, 0
    %p121 = por %p119, %p120
    %s122 = ssub.s32 %s10, %s17
    %p123 = scmp.eq.s32.totalorder %s122, 0
    %s125 = sadd.s32 %s124, 1
    %s126 = scalar_select %p123, %s124, %s125
    %p129 = pneg %p123
    %p130 = scmp.eq.s32.totalorder %s10, 1
    %p131 = por %p129, %p130
    %p132 = scmp.ne.s32.totalorder %s124, %s127
    %p133 = scmp.eq.s32.totalorder %s10, 0
    %p134 = por %p132, %p133
    %p135 = scmp.ne.s32.totalorder %s124, %s127
    %p136 = scmp.eq.s32.totalorder %s15, 1
    %p137 = por %p135, %p136
    %p138 = scmp.ne.s32.totalorder %s127, %s128
    %p139 = scmp.eq.s32.totalorder %s15, 0
    %p140 = por %p138, %p139
    %p141 = scmp.ne.s32.totalorder %s127, %s128
    %p142 = scmp.eq.s32.totalorder %s16, 1
    %p143 = por %p141, %p142
    %p145 = scmp.ne.s32.totalorder %s128, %s144
    %p146 = scmp.eq.s32.totalorder %s16, 0
    %p147 = por %p145, %p146
    %p148 = scmp.le.s32.totalorder 1, %s10
    %p149 = scmp.lt.s32.totalorder %s10, 3
    %p150 = pnand %p148, %p149
    %p151 = pneg %p150
    // Predicated region
    $region9: #{_fwd.1} parent=5 // pred_check
      _
    $region10: #{_fwd.1} parent=5 // pred_check_branch
      %153 = sbr.rel (%p150) target = $region12
    $region11: #{_fwd.1} parent=5 // pred_region
      %s154 = ssub.s32 %s10, 1
    $region12: #{_fwd.1} parent=5 // pred_fallthru
      _
    %p155 = scmp.lt.s32.totalorder %s10, 2
    // Predicated region
    $region13: #{_fwd.1} parent=5 // pred_check
      %p156 = pneg %p155
    $region14: #{_fwd.1} parent=5 // pred_check_branch
      %158 = sbr.rel (%p156) target = $region16
    $region15: #{_fwd.1} parent=5 // pred_region
      // Predicated region
      $region17: #{_fwd.1} parent=15 // pred_check
        %p159 = pneg %p30
      $region18: #{_fwd.1} parent=15 // pred_check_branch
        %161 = sbr.rel (%p159) target = $region20
      $region19: #{_fwd.1} parent=15 // pred_region
        %p162 = scmp.lt.s32.totalorder %s10, 1
        %s163 = scalar_select %p162, %s10, 1
        %s164 = smul.addr %s163, 2
        %s165 = smul.addr %s164, 8
        %s166 = scalar_lea.vmem %s0, %s165
      $region20: #{_fwd.1} parent=15 // pred_fallthru
        _
      // Predicated region
      $region21: #{_fwd.1} parent=15 // pred_check
        %p167 = pneg %p56
      $region22: #{_fwd.1} parent=15 // pred_check_branch
        %169 = sbr.rel (%p167) target = $region24
      $region23: #{_fwd.1} parent=15 // pred_region
        %p170 = scmp.lt.s32.totalorder %s10, 1
        %s171 = scalar_select %p170, %s10, 1
        %s172 = smul.addr %s171, 2
        %s173 = scalar_lea.vmem %s1, %s172
      $region24: #{_fwd.1} parent=15 // pred_fallthru
        _
      // Predicated region
      $region25: #{_fwd.1} parent=15 // pred_check
        %p174 = pneg %p82
      $region26: #{_fwd.1} parent=15 // pred_check_branch
        %176 = sbr.rel (%p174) target = $region28
      $region27: #{_fwd.1} parent=15 // pred_region
        %p177 = scmp.lt.s32.totalorder %s10, 1
        %s178 = scalar_select %p177, %s10, 1
        %s179 = smul.addr %s178, 2
        %s180 = smul.addr %s179, 8
        %s181 = scalar_lea.vmem %s2, %s180
      $region28: #{_fwd.1} parent=15 // pred_fallthru
        _
      // Predicated region
      $region29: #{_fwd.1} parent=15 // pred_check
        %p182 = pneg %p108
      $region30: #{_fwd.1} parent=15 // pred_check_branch
        %184 = sbr.rel (%p182) target = $region32
      $region31: #{_fwd.1} parent=15 // pred_region
        %p185 = scmp.lt.s32.totalorder %s10, 1
        %s186 = scalar_select %p185, %s10, 1
        %s187 = scalar_lea.vmem %s3, %s186
      $region32: #{_fwd.1} parent=15 // pred_fallthru
        _
    $region16: #{_fwd.1} parent=5 // pred_fallthru
      _
    %p188 = scmp.le.s32.totalorder 1, %s10
    %p189 = scmp.lt.s32.totalorder %s10, 3
    %p190 = pnand %p188, %p189
    %p191 = pneg %p190
    // Predicated region
    $region33: #{_fwd.1} parent=5 // pred_check
      _
    $region34: #{_fwd.1} parent=5 // pred_check_branch
      %193 = sbr.rel (%p190) target = $region36
    $region35: #{_fwd.1} parent=5 // pred_region
      %s194 = ssub.s32 %s10, 1
      %p195 = scmp.lt.s32.totalorder %s15, 1
      %s196 = scalar_select %p195, %s15, 1
      %s197 = smul.addr %s196, 2
      %s198 = smul.addr %s197, 8
      %s199 = scalar_lea.vmem %s0, %s198
      %p200 = pneg %p36
      %p201 = pneg %p33
      %p202 = scmp.lt.s32.totalorder %s15, 1
      %s203 = scalar_select %p202, %s15, 1
      %s204 = smul.addr %s203, 2
      %s205 = scalar_lea.vmem %s1, %s204
      %p206 = pneg %p62
      %p207 = pneg %p59
      %p208 = scmp.lt.s32.totalorder %s15, 1
      %s209 = scalar_select %p208, %s15, 1
      %s210 = smul.addr %s209, 2
      %s211 = smul.addr %s210, 8
      %s212 = scalar_lea.vmem %s2, %s211
      %p213 = pneg %p88
      %p214 = pneg %p85
      %p215 = scmp.lt.s32.totalorder %s15, 1
      %s216 = scalar_select %p215, %s15, 1
      %s217 = scalar_lea.vmem %s3, %s216
      %p218 = pneg %p114
      %p219 = pneg %p111
      %p220 = pneg %p140
      %p221 = pneg %p137
      %p222 = scmp.lt.s32.totalorder %s15, 1
      %s223 = scalar_select %p222, %s15, 1
      %s224 = scalar_lea.vmem %s4, %s223
      %p225 = scmp.lt.s32.totalorder %s15, 1
      %s226 = scalar_select %p225, %s15, 1
      %s227 = smul.addr %s226, 2
      %s228 = smul.addr %s227, 8
      %s229 = scalar_lea.vmem %s0, %s228
      %p230 = scmp.lt.s32.totalorder %s15, 1
      %s231 = scalar_select %p230, %s15, 1
      %s232 = smul.addr %s231, 2
      %s233 = scalar_lea.vmem %s1, %s232
      %p234 = scmp.lt.s32.totalorder %s15, 1
      %s235 = scalar_select %p234, %s15, 1
      %s236 = smul.addr %s235, 2
      %s237 = smul.addr %s236, 8
      %s238 = scalar_lea.vmem %s2, %s237
      %p239 = scmp.lt.s32.totalorder %s15, 1
      %s240 = scalar_select %p239, %s15, 1
      %s241 = scalar_lea.vmem %s3, %s240
      %p242 = scmp.lt.s32.totalorder %s15, 1
      %s243 = scalar_select %p242, %s15, 1
      %s244 = scalar_lea.vmem %s4, %s243
      %v245 = vld [vmem:[%s229] sm:$0xff]
      %v246 = vld [vmem:[%s229 + $0x8] sm:$0xff]
      %v247 = vld [vmem:[%s233] sm:$0x3]
      %v248 = vld [vmem:[%s238] sm:$0xff]
      %v249 = vld [vmem:[%s238 + $0x8] sm:$0xff]
      %v250 = vld [vmem:[%s241] sm:$0x1]
      %vm251 = vcmp.gt.f32.partialorder %v248, 0.0
      %vm252 = vcmp.gt.f32.partialorder %v249, 0.0
      %vm253 = vcmp.gt.f32.partialorder %v250, 0.0
      %v254 = vlog2.pop %v248
      %v255 = vmul.f32 %v254, 0.6931472
      %v256 = vlog2.pop %v249
      %v257 = vmul.f32 %v256, 0.6931472
      %v258 = vlog2.pop %v250
      %v259 = vmul.f32 %v258, 0.6931472
      %v260 = vsel %vm251, 1, 0
      %v261 = vsel %vm252, 1, 0
      %v262 = vcvt.s32.f32 %v260
      %v263 = vcvt.s32.f32 %v261
      %v264 = vsel %vm253, 1, 0
      %v265 = vcvt.s32.f32 %v264
      %267 = vset.pattern.permute.xlu0 0
      %268 = vperm.xlu0 %267, %v245
      %v269 = vpop.permute.xlu0 %268
      %272 = vset.pattern.permute.xlu0 0
      %273 = vperm.xlu0 %272, %v246
      %v274 = vpop.permute.xlu0 %273
      %v276 = vlaneseq
      %v277 = vshrl.u32 %v276, 7
      %v278 = vsub.s32 0, %v277
      %v279 = vrot.slane %v247, %v278
      %v280 = vsub.f32 %v269, %v279
      %v281 = vsub.f32 %v274, %v279
      %v282 = vmul.f32 %v280, %v280
      %v283 = vmul.f32 %v281, %v281
      %v284 = vadd.f32 %v282, 0.0
      %v285 = vadd.f32 %v283, 0.0
      %286 = vset.pattern.permute.xlu0 1
      %287 = vperm.xlu0 %286, %v245
      %v288 = vpop.permute.xlu0 %287
      %290 = vset.pattern.permute.xlu0 1
      %291 = vperm.xlu0 %290, %v246
      %v292 = vpop.permute.xlu0 %291
      %v294 = vlaneseq
      %v295 = vshrl.u32 %v294, 7
      %v296 = vsub.s32 1, %v295
      %v297 = vrot.slane %v247, %v296
      %v298 = vsub.f32 %v288, %v297
      %v299 = vsub.f32 %v292, %v297
      %v300 = vmul.f32 %v298, %v298
      %v301 = vmul.f32 %v299, %v299
      %v302 = vadd.f32 %v284, %v300
      %v303 = vadd.f32 %v285, %v301
      %v304 = vadd.f32 %v302, 0.0
      %v305 = vadd.f32 %v303, 0.0
      %v306 = vadd.f32 %v304, 0.0
      %v307 = vadd.f32 %v305, 0.0
      %v308 = vadd.f32 %v306, 1.837877
      %v309 = vadd.f32 %v307, 1.837877
      %v310 = vsub.f32 0.0, %v308
      %v311 = vsub.f32 0.0, %v309
      %313 = vset.pattern.permute.xlu0 0
      %314 = vperm.xlu0 %313, %v255
      %v315 = vpop.permute.xlu0 %314
      %318 = vset.pattern.permute.xlu0 0
      %319 = vperm.xlu0 %318, %v257
      %v320 = vpop.permute.xlu0 %319
      %v322 = vadd.f32 %v310, %v315
      %v323 = vadd.f32 %v311, %v320
      %v325 = vlaneseq
      %v326 = vshrl.u32 %v325, 7
      %v327 = vsub.s32 0, %v326
      %v328 = vrot.slane %v259, %v327
      %v330 = vadd.f32 %v322, %v328
      %v331 = vadd.f32 %v323, %v328
      %v332 = vmul.f32 %v330, 1.442695
      %v333 = vpow.pop %v332
      %v334 = vmul.f32 %v331, 1.442695
      %v335 = vpow.pop %v334
      %336 = vst [vmem:[#allocation2] sm:$0xff] %v333
      %337 = vst [vmem:[#allocation2 + $0x8] sm:$0xff] %v335
      %v338 = vadd.f32 %v333, %v335
      %v339 = vrot.slane %v338, 4
      %v340 = vadd.f32 %v338, %v339
      %v341 = vrot.slane %v340, 2
      %v342 = vadd.f32 %v340, %v341
      %v343 = vrot.slane %v342, 1
      %v344 = vadd.f32 %v342, %v343
      %345 = vst [vmem:[#allocation3] sm:$0x1] %v344
      %v346 = vand.u32 2147483647, %v250
      %vm347 = vcmask 1040384
      %v348 = vsel %vm347, %v346, -inf
      %349 = vmax.xlane.f32.xlu0 %v348
      %v350 = vpop.xlane.xlu0 %349
      %v351 = vrot.slane %v350, 4
      %v352 = vmax.f32 %v350, %v351
      %v353 = vrot.slane %v352, 2
      %v354 = vmax.f32 %v352, %v353
      %v355 = vrot.slane %v354, 1
      %v356 = vmax.f32 %v354, %v355
      %s357 = vtos %v356
      %s358 = smul.f32 %s357, 0.0001
      // While loop
      $region37: #{_fwd.1} parent=35 // loop_pre_header
        _
      $region38: #{_fwd.1} parent=35 // loop_header
        %s360 = sphi 0, %s533
        %p361 = pphi 0, %p458
        %v362 = vphi %v262, %v485
        %v363 = vphi %v263, %v486
        %v364 = vphi %v265, %v487
        %v365 = vphi 0.0, %v481
        %v366 = vphi 0.0, %v482
        %v367 = vphi 0.0, %v484
        %p368 = scmp.lt.s32.totalorder %s360, 50
        %p369 = pneg %p361
        %p370 = pnand %p368, %p369
        %p371 = pneg %p370
      $region39: #{_fwd.1} parent=35 // loop_header_branch
        %373 = sbr.rel (%p370) target = $region43
      $region40: #{_fwd.1} parent=35 // loop_body
        %v374 = vld [vmem:[#allocation2] sm:$0xff]
        %v375 = vld [vmem:[#allocation2 + $0x8] sm:$0xff]
        %v376 = vld [vmem:[#allocation3] sm:$0x1]
        %v377 = vmax.f32 %v376, 1e-30
        %v378 = vrcp.pop %v377
        %v379 = vmul.f32 %v250, %v378
        %v381 = vlaneseq
        %v382 = vshrl.u32 %v381, 7
        %v383 = vsub.s32 0, %v382
        %v384 = vrot.slane %v379, %v383
        %v386 = vmul.f32 %v374, %v384
        %v387 = vmul.f32 %v375, %v384
        %388 = vadd.xlane.f32.xlu0 %v386
        %v389 = vpop.xlane.xlu0 %388
        %390 = vadd.xlane.f32.xlu0 %v387
        %v391 = vpop.xlane.xlu0 %390
        %v392 = vmax.f32 %v389, 1e-30
        %v393 = vmax.f32 %v391, 1e-30
        %v394 = vrcp.pop %v392
        %v395 = vmul.f32 %v248, %v394
        %v396 = vrcp.pop %v393
        %v397 = vmul.f32 %v249, %v396
        %399 = vset.pattern.permute.xlu0 0
        %400 = vperm.xlu0 %399, %v395
        %v401 = vpop.permute.xlu0 %400
        %404 = vset.pattern.permute.xlu0 0
        %405 = vperm.xlu0 %404, %v397
        %v406 = vpop.permute.xlu0 %405
        %v408 = vmul.f32 %v374, %v401
        %v409 = vmul.f32 %v375, %v406
        %v410 = vadd.f32 %v408, %v409
        %v411 = vrot.slane %v410, 4
        %v412 = vadd.f32 %v410, %v411
        %v413 = vrot.slane %v412, 2
        %v414 = vadd.f32 %v412, %v413
        %v415 = vrot.slane %v414, 1
        %v416 = vadd.f32 %v414, %v415
        %v417 = vand.u32 2147483647, %v395
        %v418 = vand.u32 2147483647, %v397
        %vm419 = vcmask 7168
        %v420 = vsel %vm419, %v417, -inf
        %v421 = vsel %vm419, %v418, -inf
        %v422 = vmax.f32 %v420, %v421
        %423 = vmax.xlane.f32.xlu0 %v422
        %v424 = vpop.xlane.xlu0 %423
        %v425 = vrot.slane %v424, 4
        %v426 = vmax.f32 %v424, %v425
        %v427 = vrot.slane %v426, 2
        %v428 = vmax.f32 %v426, %v427
        %v429 = vrot.slane %v428, 1
        %v430 = vmax.f32 %v428, %v429
        %s431 = vtos %v430
        %v432 = vand.u32 2147483647, %v379
        %v433 = vsel %vm347, %v432, -inf
        %434 = vmax.xlane.f32.xlu0 %v433
        %v435 = vpop.xlane.xlu0 %434
        %v436 = vrot.slane %v435, 4
        %v437 = vmax.f32 %v435, %v436
        %v438 = vrot.slane %v437, 2
        %v439 = vmax.f32 %v437, %v438
        %v440 = vrot.slane %v439, 1
        %v441 = vmax.f32 %v439, %v440
        %s442 = vtos %v441
        %v443 = vmul.f32 %v379, %v416
        %v444 = vsub.f32 %v443, %v250
        %v445 = vand.u32 2147483647, %v444
        %v446 = vsel %vm347, %v445, -inf
        %447 = vmax.xlane.f32.xlu0 %v446
        %v448 = vpop.xlane.xlu0 %447
        %v449 = vrot.slane %v448, 4
        %v450 = vmax.f32 %v448, %v449
        %v451 = vrot.slane %v450, 2
        %v452 = vmax.f32 %v450, %v451
        %v453 = vrot.slane %v452, 1
        %v454 = vmax.f32 %v452, %v453
        %s455 = vtos %v454
        %p456 = scmp.lt.f32.partialorder %s455, 0.0001
        %p457 = scmp.lt.f32.partialorder %s455, %s358
        %p458 = por %p456, %p457
        %s459 = smax.f32 %s431, %s442
        %p460 = scmp.gt.f32.partialorder %s459, 100.0
        %p461 = pneg %p458
        %p462 = pnand %p460, %p461
        %p463 = pneg %p462
        %v464 = vmax.f32 %v395, 1e-30
        %v465 = vmax.f32 %v397, 1e-30
        %v466 = vlog2.pop %v464
        %v467 = vmul.f32 %v466, 0.6931472
        %v468 = vlog2.pop %v465
        %v469 = vmul.f32 %v468, 0.6931472
        %v470 = vsel %vm251, %v467, 0.0
        %v471 = vsel %vm252, %v469, 0.0
        %v472 = vmax.f32 %v379, 1e-30
        %v473 = vlog2.pop %v472
        %v474 = vmul.f32 %v473, 0.6931472
        %v475 = vsel %vm253, %v474, 0.0
        %v476 = vsub.f32 %v365, %v470
        %v477 = vsub.f32 %v366, %v471
        %s478 = scalar_select %p463, 1, 0
        %v479 = vstv %s478
        %vm480 = vcmp.eq.s32.totalorder %v479, 1
        %v481 = vsel %vm480, %v476, %v365
        %v482 = vsel %vm480, %v477, %v366
        %v483 = vsub.f32 %v367, %v475
        %v484 = vsel %vm480, %v483, %v367
        %v485 = vsel %vm480, 1.0, %v395
        %v486 = vsel %vm480, 1.0, %v397
        %v487 = vsel %vm480, 1.0, %v379
        %488 = vst [vmem:[#allocation3] sm:$0x1] %v416
        // Predicated region
        $region44: #{_fwd.1} parent=40 // pred_check
          _
        $region45: #{_fwd.1} parent=40 // pred_check_branch
          %490 = sbr.rel (%p462) target = $region47
        $region46: #{_fwd.1} parent=40 // pred_region
          %492 = vset.pattern.permute.xlu0 0
          %493 = vperm.xlu0 %492, %v481
          %v494 = vpop.permute.xlu0 %493
          %497 = vset.pattern.permute.xlu0 0
          %498 = vperm.xlu0 %497, %v482
          %v499 = vpop.permute.xlu0 %498
          %v501 = vadd.f32 %v302, %v494
          %v502 = vadd.f32 %v303, %v499
          %v504 = vlaneseq
          %v505 = vshrl.u32 %v504, 7
          %v506 = vsub.s32 0, %v505
          %v507 = vrot.slane %v484, %v506
          %v509 = vadd.f32 %v501, %v507
          %v510 = vadd.f32 %v502, %v507
          %v511 = vadd.f32 %v509, 1.837877
          %v512 = vadd.f32 %v510, 1.837877
          %v513 = vsub.f32 0.0, %v511
          %v514 = vsub.f32 0.0, %v512
          %v515 = vadd.f32 %v513, %v315
          %v516 = vadd.f32 %v514, %v320
          %v517 = vadd.f32 %v515, %v328
          %v518 = vadd.f32 %v516, %v328
          %v519 = vmul.f32 %v517, 1.442695
          %v520 = vpow.pop %v519
          %v521 = vmul.f32 %v518, 1.442695
          %v522 = vpow.pop %v521
          %523 = vst [vmem:[#allocation2] sm:$0xff] %v520
          %524 = vst [vmem:[#allocation2 + $0x8] sm:$0xff] %v522
          %v525 = vadd.f32 %v520, %v522
          %v526 = vrot.slane %v525, 4
          %v527 = vadd.f32 %v525, %v526
          %v528 = vrot.slane %v527, 2
          %v529 = vadd.f32 %v527, %v528
          %v530 = vrot.slane %v529, 1
          %v531 = vadd.f32 %v529, %v530
          %532 = vst [vmem:[#allocation3] sm:$0x1] %v531
        $region47: #{_fwd.1} parent=40 // pred_fallthru
          _
        %s533 = sadd.s32 %s360, 1
      $region41: #{_fwd.1} parent=35 // loop_footer
        _
      $region42: #{_fwd.1} parent=35 // loop_footer_branch
        %359 = sbr.rel target = $region38
      $region43: #{_fwd.1} parent=35 // loop_exit
        _
      %v534 = vmax.f32 %v362, 1e-30
      %v535 = vmax.f32 %v363, 1e-30
      %v536 = vlog2.pop %v534
      %v537 = vmul.f32 %v536, 0.6931472
      %v538 = vlog2.pop %v535
      %v539 = vmul.f32 %v538, 0.6931472
      %v540 = vsel %vm251, %v537, 0.0
      %v541 = vsel %vm252, %v539, 0.0
      %v542 = vmax.f32 %v364, 1e-30
      %v543 = vlog2.pop %v542
      %v544 = vmul.f32 %v543, 0.6931472
      %v545 = vsel %vm253, %v544, 0.0
      %v546 = vsub.f32 %v365, %v540
      %v547 = vsub.f32 %v366, %v541
      %v548 = vsub.f32 %v367, %v545
      %v549 = vsub.f32 0.0, %v302
      %v550 = vsub.f32 0.0, %v303
      %v552 = vlaneseq
      %v553 = vshrl.u32 %v552, 7
      %v554 = vsub.s32 0, %v553
      %v555 = vrot.slane %v548, %v554
      %v557 = vsub.f32 %v549, %v555
      %v558 = vsub.f32 %v550, %v555
      %v559 = vadd.f32 %v557, %v328
      %v560 = vadd.f32 %v558, %v328
      %561 = vmax.xlane.f32.xlu0 %v559
      %v562 = vpop.xlane.xlu0 %561
      %563 = vmax.xlane.f32.xlu0 %v560
      %v564 = vpop.xlane.xlu0 %563
      %v565 = vsub.f32 %v559, %v562
      %v566 = vsub.f32 %v560, %v564
      %v567 = vmul.f32 %v565, 1.442695
      %v568 = vpow.pop %v567
      %v569 = vmul.f32 %v566, 1.442695
      %v570 = vpow.pop %v569
      %571 = vadd.xlane.f32.xlu0 %v568
      %v572 = vpop.xlane.xlu0 %571
      %573 = vadd.xlane.f32.xlu0 %v570
      %v574 = vpop.xlane.xlu0 %573
      %v575 = vlog2.pop %v572
      %v576 = vmul.f32 %v575, 0.6931472
      %v577 = vlog2.pop %v574
      %v578 = vmul.f32 %v577, 0.6931472
      %v579 = vadd.f32 %v562, %v576
      %v580 = vadd.f32 %v564, %v578
      %v581 = vsub.f32 %v579, 1.837877
      %v582 = vsub.f32 %v580, 1.837877
      %v583 = vsel %vm251, %v581, 0.0
      %v584 = vsel %vm252, %v582, 0.0
      %586 = vset.pattern.permute.xlu0 0
      %587 = vperm.xlu0 %586, %v546
      %v588 = vpop.permute.xlu0 %587
      %591 = vset.pattern.permute.xlu0 0
      %592 = vperm.xlu0 %591, %v547
      %v593 = vpop.permute.xlu0 %592
      %v595 = vsub.f32 %v549, %v588
      %v596 = vsub.f32 %v550, %v593
      %v597 = vadd.f32 %v595, %v315
      %v598 = vadd.f32 %v596, %v320
      %v599 = vmax.f32 %v597, %v598
      %v600 = vrot.slane %v599, 4
      %v601 = vmax.f32 %v599, %v600
      %v602 = vrot.slane %v601, 2
      %v603 = vmax.f32 %v601, %v602
      %v604 = vrot.slane %v603, 1
      %v605 = vmax.f32 %v603, %v604
      %v606 = vsub.f32 %v597, %v605
      %v607 = vsub.f32 %v598, %v605
      %v608 = vmul.f32 %v606, 1.442695
      %v609 = vpow.pop %v608
      %v610 = vmul.f32 %v607, 1.442695
      %v611 = vpow.pop %v610
      %v612 = vadd.f32 %v609, %v611
      %v613 = vrot.slane %v612, 4
      %v614 = vadd.f32 %v612, %v613
      %v615 = vrot.slane %v614, 2
      %v616 = vadd.f32 %v614, %v615
      %v617 = vrot.slane %v616, 1
      %v618 = vadd.f32 %v616, %v617
      %v619 = vlog2.pop %v618
      %v620 = vmul.f32 %v619, 0.6931472
      %v621 = vadd.f32 %v605, %v620
      %v622 = vsub.f32 %v621, 1.837877
      %v623 = vsel %vm253, %v622, 0.0
      %v624 = vmul.f32 %v583, %v248
      %v625 = vmul.f32 %v584, %v249
      %vm626 = vcmask 7168
      %v627 = vsel %vm626, %v624, 0.0
      %v628 = vsel %vm626, %v625, 0.0
      %v629 = vadd.f32 %v627, %v628
      %630 = vadd.xlane.f32.xlu0 %v629
      %v631 = vpop.xlane.xlu0 %630
      %v632 = vrot.slane %v631, 4
      %v633 = vadd.f32 %v631, %v632
      %v634 = vrot.slane %v633, 2
      %v635 = vadd.f32 %v633, %v634
      %v636 = vrot.slane %v635, 1
      %v637 = vadd.f32 %v635, %v636
      %s638 = vtos %v637
      %v639 = vmul.f32 %v623, %v250
      %v640 = vsel %vm347, %v639, 0.0
      %641 = vadd.xlane.f32.xlu0 %v640
      %v642 = vpop.xlane.xlu0 %641
      %v643 = vrot.slane %v642, 4
      %v644 = vadd.f32 %v642, %v643
      %v645 = vrot.slane %v644, 2
      %v646 = vadd.f32 %v644, %v645
      %v647 = vrot.slane %v646, 1
      %v648 = vadd.f32 %v646, %v647
      %s649 = vtos %v648
      %651 = vset.pattern.permute.xlu0 0
      %652 = vperm.xlu0 %651, %v583
      %v653 = vpop.permute.xlu0 %652
      %656 = vset.pattern.permute.xlu0 0
      %657 = vperm.xlu0 %656, %v584
      %v658 = vpop.permute.xlu0 %657
      %v660 = vadd.f32 %v302, %v653
      %v661 = vadd.f32 %v303, %v658
      %v663 = vlaneseq
      %v664 = vshrl.u32 %v663, 7
      %v665 = vsub.s32 0, %v664
      %v666 = vrot.slane %v623, %v665
      %v668 = vadd.f32 %v660, %v666
      %v669 = vadd.f32 %v661, %v666
      %v670 = vadd.f32 %v668, 1.837877
      %v671 = vadd.f32 %v669, 1.837877
      %v672 = vsub.f32 0.0, %v670
      %v673 = vsub.f32 0.0, %v671
      %v674 = vadd.f32 %v672, %v315
      %v675 = vadd.f32 %v673, %v320
      %v676 = vadd.f32 %v674, %v328
      %v677 = vadd.f32 %v675, %v328
      %v678 = vmul.f32 %v676, 1.442695
      %v679 = vpow.pop %v678
      %v680 = vmul.f32 %v677, 1.442695
      %v681 = vpow.pop %v680
      %v682 = vadd.f32 %v679, %v681
      %683 = vadd.xlane.f32.xlu0 %v682
      %v684 = vpop.xlane.xlu0 %683
      %v685 = vrot.slane %v684, 4
      %v686 = vadd.f32 %v684, %v685
      %v687 = vrot.slane %v686, 2
      %v688 = vadd.f32 %v686, %v687
      %v689 = vrot.slane %v688, 1
      %v690 = vadd.f32 %v688, %v689
      %s691 = vtos %v690
      %s692 = ssub.f32 0.0, %s638
      %s693 = ssub.f32 %s692, %s649
      %s694 = ssub.f32 %s693, %s691
      %v695 = vstv %s694
      %696 = vst [vmem:[%s244] sm:$0x1] %v695
      %p697 = scmp.lt.s32.totalorder %s15, 1
      %s698 = scalar_select %p697, %s15, 1
      %s699 = scalar_lea.vmem %s4, %s698
      // Predicated region
      $region48: #{_fwd.1} parent=35 // pred_check
        %p700 = pneg %p137
      $region49: #{_fwd.1} parent=35 // pred_check_branch
        %702 = sbr.rel (%p700) target = $region51
      $region50: #{_fwd.1} parent=35 // pred_region
        _
      $region51: #{_fwd.1} parent=35 // pred_fallthru
        _
    $region36: #{_fwd.1} parent=5 // pred_fallthru
      _
    %p703 = scmp.le.s32.totalorder 2, %s10
    // Predicated region
    $region52: #{_fwd.1} parent=5 // pred_check
      %p704 = pneg %p703
    $region53: #{_fwd.1} parent=5 // pred_check_branch
      %706 = sbr.rel (%p704) target = $region55
    $region54: #{_fwd.1} parent=5 // pred_region
      %s707 = ssub.s32 %s10, 2
      // Predicated region
      $region56: #{_fwd.1} parent=54 // pred_check
        %p708 = pneg %p143
      $region57: #{_fwd.1} parent=54 // pred_check_branch
        %710 = sbr.rel (%p708) target = $region59
      $region58: #{_fwd.1} parent=54 // pred_region
        %p711 = scmp.lt.s32.totalorder %s16, 1
        %s712 = scalar_select %p711, %s16, 1
        %s713 = scalar_lea.vmem %s4, %s712
      $region59: #{_fwd.1} parent=54 // pred_fallthru
        _
    $region55: #{_fwd.1} parent=5 // pred_fallthru
      _
  $region6: #{_fwd.1} parent=0 // loop_footer
    %s14 = sadd.s32 1, %s10
  $region7: #{_fwd.1} parent=0 // loop_footer_branch
    %9 = sbr.rel target = $region3
  $region8: #{_fwd.1} parent=0 // loop_exit
    _

</llo_original>
